<compile_context>
chip_gen: v6e
topology: v6e:2x2x1
jax: 0.10.0
libtpu: 0.0.40
codegen_flags: <defaults>
</compile_context>

<pallas_src>
import jax
import jax.numpy as jnp
from jax.experimental import pallas as pl
from jax.experimental.pallas import tpu as pltpu

PACK = 8  # rows folded into the lane axis -> output slab width 8 * d_obs = 128


def _mapping_kernel(z_ref, w_ref, b_ref, o_ref):
    # z_ref: (tile_r, PACK*d_latent)      lane-dense input rows
    # w_ref: (PACK*d_latent, PACK*d_obs)  block-diagonal weight (resident)
    # b_ref: (1, PACK*d_obs)              tiled bias            (resident)
    # o_ref: (tile_r, PACK*d_obs)         128-lane-dense output -> unmasked vst
    y = jax.lax.dot_general(
        z_ref[...],
        w_ref[...],
        dimension_numbers=(((1,), (0,)), ((), ())),
        preferred_element_type=jnp.float32,   # DEFAULT precision: 1 bf16 pass
    ) + b_ref[...]
    # numerically-stable softplus: max(y, 0) + log1p(exp(-|y|))
    sp = jnp.maximum(y, 0.0) + jnp.log1p(jnp.exp(-jnp.abs(y)))
    o_ref[...] = sp.astype(o_ref.dtype)


def pack_mapping_params(weight, bias):
    """One-time parameter repack (hoisted out of the per-step forward path).

    weight: (d_obs, d_latent), bias: (d_obs,)
    Returns:
      w_big: (PACK*d_latent, PACK*d_obs) block-diagonal kron(I_PACK, W.T)
      b_big: (1, PACK*d_obs)             bias tiled PACK times
    """
    d_obs = weight.shape[0]
    w_big = jnp.kron(jnp.eye(PACK, dtype=weight.dtype), weight.T)
    b_big = jnp.tile(bias, PACK).reshape(1, PACK * d_obs)
    return w_big, b_big


def base_mapping_forward(z, w_big, b_big, *, block_rows=32768):
    """z: (B, T, d_latent) f32; w_big/b_big from pack_mapping_params.

    block_rows = unpacked rows per grid step.  Defaults to 32768 (~12 MiB
    double-buffered), a good middle ground for v5e/v6e/v7x; sweep 16K-64K per
    generation if needed.  vmem_limit_bytes is set explicitly from the actual
    footprint so the v5e 16 MiB scoped default never shrinks buffering.
    """
    B, T, d_latent = z.shape
    d_obs = w_big.shape[1] // PACK
    N = B * T

    # ---- wrapper-side lane-dense packing (zero-copy row-major reshapes) ----
    N_main = (N // PACK) * PACK            # PACK-aligned prefix handled by kernel
    R = N_main // PACK                     # packed rows

    z2d = z.reshape(N, d_latent)

    if R > 0:
        z_main = z2d[:N_main].reshape(R, PACK * d_latent)   # (R, PACK*d_latent)

        # Tile size over packed rows: sublane-aligned, ragged last block allowed.
        target_r = max(block_rows // PACK, 8)
        if R <= 8:
            tile_r = R                        # block equals full array extent
        else:
            tile_r = min(target_r, R)
            tile_r = max(8, (tile_r // 8) * 8)
        num_tiles = pl.cdiv(R, tile_r)        # ragged final block: no padding

        # Explicit VMEM budget: double-buffered tiles + resident weight/bias.
        in_tile_b = tile_r * PACK * d_latent * 4
        out_tile_b = tile_r * PACK * d_obs * 4
        resident_b = int(w_big.size + b_big.size) * 4
        vmem_need = 2 * (in_tile_b + out_tile_b) + 2 * resident_b
        vmem_limit = min(max(int(vmem_need * 1.5) + (2 << 20), 32 << 20), 48 << 20)

        flops = 2 * N_main * d_latent * d_obs          # useful flops
        transcendentals = 2 * N_main * d_obs           # exp + log1p per output
        bytes_accessed = 4 * (N_main * d_latent + int(w_big.size)
                              + int(b_big.size) + N_main * d_obs)

        out_packed = pl.pallas_call(
            _mapping_kernel,
            out_shape=jax.ShapeDtypeStruct((R, PACK * d_obs), jnp.float32),
            grid=(num_tiles,),
            in_specs=[
                pl.BlockSpec((tile_r, PACK * d_latent), lambda i: (i, 0)),
                pl.BlockSpec((PACK * d_latent, PACK * d_obs), lambda i: (0, 0)),
                pl.BlockSpec((1, PACK * d_obs), lambda i: (0, 0)),
            ],
            out_specs=pl.BlockSpec((tile_r, PACK * d_obs), lambda i: (i, 0)),
            compiler_params=pltpu.CompilerParams(
                dimension_semantics=("parallel",),   # megacore / pipelined
                vmem_limit_bytes=vmem_limit,
            ),
            cost_estimate=pl.CostEstimate(
                flops=flops,
                transcendentals=transcendentals,
                bytes_accessed=bytes_accessed,
            ),
        )(z_main, w_big, b_big)

        out2d = out_packed.reshape(N_main, d_obs)      # free row-major reshape
    else:
        out2d = jnp.zeros((0, d_obs), dtype=jnp.float32)

    # <8-row tail (only when N % PACK != 0): tiny plain-JAX epilogue.
    if N_main != N:
        w_t = w_big[:d_latent, :d_obs]                 # = weight.T (top-left block)
        b = b_big[0, :d_obs]
        y_t = jnp.dot(z2d[N_main:], w_t, preferred_element_type=jnp.float32) + b
        sp_t = jnp.maximum(y_t, 0.0) + jnp.log1p(jnp.exp(-jnp.abs(y_t)))
        out2d = jnp.concatenate([out2d, sp_t.astype(jnp.float32)], axis=0)

    return out2d.reshape(B, T, d_obs)


if __name__ == "__main__":
    key = jax.random.PRNGKey(0)
    k_z, k_w, k_b = jax.random.split(key, 3)

    B, T, d_latent, d_obs = 2, 8, 32, 16

    z = jax.random.normal(k_z, (B, T, d_latent), dtype=jnp.float32)
    # deterministic "nn.Linear(d_latent, d_obs)"-shaped params
    weight = jax.random.normal(k_w, (d_obs, d_latent), dtype=jnp.float32) * 0.1
    bias = jax.random.normal(k_b, (d_obs,), dtype=jnp.float32) * 0.1

    # One-time parameter repack (hoisted out of the per-call forward path).
    w_big, b_big = pack_mapping_params(weight, bias)
    w_big, b_big = jax.block_until_ready((w_big, b_big))

    out = base_mapping_forward(z, w_big, b_big)
    jax.block_until_ready(out)

    # Sanity check against a full-precision JAX reference.  The kernel uses
    # DEFAULT (single-pass bf16) MXU precision, so tolerance is relaxed.
    y_ref = jnp.dot(z.reshape(B * T, d_latent), weight.T,
                    precision=jax.lax.Precision.HIGHEST) + bias
    ref = jax.nn.softplus(y_ref).reshape(B, T, d_obs)
    assert out.shape == (B, T, d_obs)
    assert jnp.allclose(out, ref, atol=2e-2, rtol=2e-2)

    print("KERNEL_OK")
</pallas_src>

<mosaic_0001>
module attributes {stable_mosaic.version = 11 : i64} {
  func.func @_mapping_kernel(%arg0: i32, %arg1: memref<2x256xf32, #tpu.memory_space<vmem>>, %arg2: memref<256x128xf32, #tpu.memory_space<vmem>>, %arg3: memref<1x128xf32, #tpu.memory_space<vmem>>, %arg4: memref<2x128xf32, #tpu.memory_space<vmem>>) attributes {dimension_semantics = [#tpu.dimension_semantics<parallel>], iteration_bounds = array<i64: 1>, scalar_prefetch = 0 : i64, scratch_operands = 0 : i64, tpu.core_type = #tpu.core_type<tc>, window_params = [{transform_indices = @transform_0, window_bounds = array<i64: 2, 256>}, {pipeline_mode = #tpu.pipeline_mode<synchronous>, transform_indices = @transform_1, window_bounds = array<i64: 256, 128>}, {pipeline_mode = #tpu.pipeline_mode<synchronous>, transform_indices = @transform_2, window_bounds = array<i64: 1, 128>}, {transform_indices = @transform_3, window_bounds = array<i64: 2, 128>}]} {
    %c0 = arith.constant 0 : index
    %c0_0 = arith.constant 0 : index
    %0 = vector.load %arg1[%c0, %c0_0] : memref<2x256xf32, #tpu.memory_space<vmem>>, vector<2x256xf32>
    %c0_1 = arith.constant 0 : index
    %c0_2 = arith.constant 0 : index
    %1 = vector.load %arg2[%c0_1, %c0_2] : memref<256x128xf32, #tpu.memory_space<vmem>>, vector<256x128xf32>
    %cst = arith.constant dense<0.000000e+00> : vector<2x128xf32>
    %2 = tpu.matmul %0, %1, %cst {dimension_numbers = #tpu.dot_dimension_numbers<[1], [0], [0], [1], [0, 0, 1, 1], [], []>} : vector<2x256xf32>, vector<256x128xf32>, vector<2x128xf32> -> vector<2x128xf32>
    %c0_3 = arith.constant 0 : index
    %c0_4 = arith.constant 0 : index
    %3 = vector.load %arg3[%c0_3, %c0_4] : memref<1x128xf32, #tpu.memory_space<vmem>>, vector<1x128xf32>
    %4 = vector.broadcast %3 : vector<1x128xf32> to vector<2x128xf32>
    %5 = arith.addf %2, %4 : vector<2x128xf32>
    %cst_5 = arith.constant 0.000000e+00 : f32
    %6 = vector.broadcast %cst_5 : f32 to vector<2x128xf32>
    %7 = arith.maximumf %5, %6 : vector<2x128xf32>
    %8 = math.absf %5 : vector<2x128xf32>
    %cst_6 = arith.constant 0.000000e+00 : f32
    %9 = vector.broadcast %cst_6 : f32 to vector<2x128xf32>
    %10 = arith.subf %9, %8 : vector<2x128xf32>
    %11 = math.exp %10 : vector<2x128xf32>
    %12 = math.log1p %11 : vector<2x128xf32>
    %13 = arith.addf %7, %12 : vector<2x128xf32>
    %c0_7 = arith.constant 0 : index
    %c0_8 = arith.constant 0 : index
    %14 = vector.load %arg4[%c0_7, %c0_8] : memref<2x128xf32, #tpu.memory_space<vmem>>, vector<2x128xf32>
    tpu.vector_store %arg4[%c0_7, %c0_8], %13 {strides = array<i32>} : memref<2x128xf32, #tpu.memory_space<vmem>>, vector<2x128xf32>,
    return
  }
  func.func @transform_0(%arg0: i32) -> (i32, i32) {
    %c0_i32 = arith.constant 0 : i32
    %c0_i32_0 = arith.constant 0 : i32
    return %arg0, %c0_i32 : i32, i32
  }
  func.func @transform_1(%arg0: i32) -> (i32, i32) {
    %c0_i32 = arith.constant 0 : i32
    %c0_i32_0 = arith.constant 0 : i32
    %c0_i32_1 = arith.constant 0 : i32
    return %c0_i32, %c0_i32_0 : i32, i32
  }
  func.func @transform_2(%arg0: i32) -> (i32, i32) {
    %c0_i32 = arith.constant 0 : i32
    %c0_i32_0 = arith.constant 0 : i32
    %c0_i32_1 = arith.constant 0 : i32
    return %c0_i32, %c0_i32_0 : i32, i32
  }
  func.func @transform_3(%arg0: i32) -> (i32, i32) {
    %c0_i32 = arith.constant 0 : i32
    %c0_i32_0 = arith.constant 0 : i32
    return %arg0, %c0_i32 : i32, i32
  }
}

</mosaic_0001>

<llo_original>
// kernel: tpu_custom_call.1
$region0: #{tpu_custom_call.1}
  #allocation0 [shape = 'u32[]', space=smem, size = 0x4, offset = 0x4, fixed_abs, tag = 'smem constant byte address 0x4 - core index']
  #allocation1 [shape = 'u32[144,128]{1,0:T(1,128)}', space=vmem, size = 0x12000, scoped, tag = 'internal scratch']
  %s0 = inlined_call_operand.hbm [shape: f32[2,256], index: 0, kind: input, shape index: {}]
  %s1 = inlined_call_operand.hbm [shape: f32[256,128], index: 1, kind: input, shape index: {}]
  %s2 = inlined_call_operand.vmem [shape: f32[1,128], index: 2, kind: input, shape index: {}]
  %s3 = inlined_call_operand.hbm [shape: f32[2,128], index: 3, kind: output, shape index: {}]
  %s4 = sld [smem:[#allocation0]]
  $region30: #{tpu_custom_call.1} parent=0
    _
  %s6 = ssub.s32 1, %s4
  %s7 = scalar_select 0, %s6, %s4
  $region1: #{tpu_custom_call.1} parent=0
    #allocation2 [shape = 'u8[2048]{0}', space=vmem, size = 0x800, scoped, tag = 'input window, operand 0, single buffered']
    #allocation3 [shape = 's32[1]{0}', space=sflag, size = 0x4, scoped, tag = 'scoped memory for tpu_custom_call.1']
    #allocation4 [shape = 's32[1]{0}', space=sflag, size = 0x4, scoped, tag = 'scoped memory for tpu_custom_call.1']
    #allocation5 [shape = 'u8[131072]{0}', space=vmem, size = 0x20000, scoped, tag = 'input window, operand 1, single buffered']
    #allocation6 [shape = 's32[1]{0}', space=sflag, size = 0x4, scoped, tag = 'scoped memory for tpu_custom_call.1']
    #allocation7 [shape = 'u8[1024]{0}', space=vmem, size = 0x400, scoped, tag = 'output window, operand 0, single buffered']
    %8 = vsyncpa [#allocation3], 0
    %9 = vsyncpa [#allocation6], 0
    %10 = vsyncpa [#allocation4], 0
    // Predicated region
    $region2: #{tpu_custom_call.1} parent=1 // pred_check
      _
    $region3: #{tpu_custom_call.1} parent=1 // pred_check_branch
      %12 = sbr.rel (0) target = $region5
    $region4: #{tpu_custom_call.1} parent=1 // pred_region
      %s14 = ssub.s32 64, 64
      %15 = vsyncadd [#allocation3], %s14
      %s17 = sshll.u32 [#allocation2], 4
      %s18 = int_to_ptr.vmem [resolvable:$true] %s17
      %20 = dma.hbm_to_vmem [thread:$0]  %s0, 64, %s18, [#allocation3]
    $region5: #{tpu_custom_call.1} parent=1 // pred_fallthru
      _
    // Predicated region
    $region6: #{tpu_custom_call.1} parent=1 // pred_check
      _
    $region7: #{tpu_custom_call.1} parent=1 // pred_check_branch
      %22 = sbr.rel (0) target = $region9
    $region8: #{tpu_custom_call.1} parent=1 // pred_region
      %s24 = ssub.s32 4096, 4096
      %25 = vsyncadd [#allocation6], %s24
      %s26 = sshll.u32 [#allocation5], 4
      %s27 = int_to_ptr.vmem [resolvable:$true] %s26
      %32 = dma.hbm_to_vmem [thread:$0]  %s1, 4096, %s27, [#allocation6], 128, 128, 8
    $region9: #{tpu_custom_call.1} parent=1 // pred_fallthru
      _
    // Predicated region
    $region10: #{tpu_custom_call.1} parent=1 // pred_check
      _
    $region11: #{tpu_custom_call.1} parent=1 // pred_check_branch
      %34 = sbr.rel (0) target = $region13
    $region12: #{tpu_custom_call.1} parent=1 // pred_region
      _
    $region13: #{tpu_custom_call.1} parent=1 // pred_fallthru
      _
    // Predicated region
    $region14: #{tpu_custom_call.1} parent=1 // pred_check
      _
    $region15: #{tpu_custom_call.1} parent=1 // pred_check_branch
      %36 = sbr.rel (0) target = $region17
    $region16: #{tpu_custom_call.1} parent=1 // pred_region
      %37 = dma.done [#allocation3], 64
    $region17: #{tpu_custom_call.1} parent=1 // pred_fallthru
      _
    // Predicated region
    $region18: #{tpu_custom_call.1} parent=1 // pred_check
      _
    $region19: #{tpu_custom_call.1} parent=1 // pred_check_branch
      %39 = sbr.rel (0) target = $region21
    $region20: #{tpu_custom_call.1} parent=1 // pred_region
      %40 = dma.done [#allocation6], 4096
    $region21: #{tpu_custom_call.1} parent=1 // pred_fallthru
      _
    %v41 = vld [vmem:[#allocation2] sm:$0xf]
    %v42 = vld [vmem:[#allocation5] sm:$0xff]
    %v43 = vld [vmem:[#allocation5 + $0x8] sm:$0xff]
    %v44 = vld [vmem:[#allocation5 + $0x10] sm:$0xff]
    %v45 = vld [vmem:[#allocation5 + $0x18] sm:$0xff]
    %v46 = vld [vmem:[#allocation5 + $0x20] sm:$0xff]
    %v47 = vld [vmem:[#allocation5 + $0x28] sm:$0xff]
    %v48 = vld [vmem:[#allocation5 + $0x30] sm:$0xff]
    %v49 = vld [vmem:[#allocation5 + $0x38] sm:$0xff]
    %v50 = vld [vmem:[#allocation5 + $0x40] sm:$0xff]
    %v51 = vld [vmem:[#allocation5 + $0x48] sm:$0xff]
    %v52 = vld [vmem:[#allocation5 + $0x50] sm:$0xff]
    %v53 = vld [vmem:[#allocation5 + $0x58] sm:$0xff]
    %v54 = vld [vmem:[#allocation5 + $0x60] sm:$0xff]
    %v55 = vld [vmem:[#allocation5 + $0x68] sm:$0xff]
    %v56 = vld [vmem:[#allocation5 + $0x70] sm:$0xff]
    %v57 = vld [vmem:[#allocation5 + $0x78] sm:$0xff]
    %v58 = vld [vmem:[#allocation5 + $0x80] sm:$0xff]
    %v59 = vld [vmem:[#allocation5 + $0x88] sm:$0xff]
    %v60 = vld [vmem:[#allocation5 + $0x90] sm:$0xff]
    %v61 = vld [vmem:[#allocation5 + $0x98] sm:$0xff]
    %v62 = vld [vmem:[#allocation5 + $0xa0] sm:$0xff]
    %v63 = vld [vmem:[#allocation5 + $0xa8] sm:$0xff]
    %v64 = vld [vmem:[#allocation5 + $0xb0] sm:$0xff]
    %v65 = vld [vmem:[#allocation5 + $0xb8] sm:$0xff]
    %v66 = vld [vmem:[#allocation5 + $0xc0] sm:$0xff]
    %v67 = vld [vmem:[#allocation5 + $0xc8] sm:$0xff]
    %v68 = vld [vmem:[#allocation5 + $0xd0] sm:$0xff]
    %v69 = vld [vmem:[#allocation5 + $0xd8] sm:$0xff]
    %v70 = vld [vmem:[#allocation5 + $0xe0] sm:$0xff]
    %v71 = vld [vmem:[#allocation5 + $0xe8] sm:$0xff]
    %v72 = vld [vmem:[#allocation5 + $0xf0] sm:$0xff]
    %v73 = vld [vmem:[#allocation5 + $0xf8] sm:$0xff]
    %v74 = vld [vmem:[%s2] sm:$0x1]
    %v76 = vlaneseq
    %v77 = vshrl.u32 %v76, 7
    %v78 = vsub.s32 0, %v77
    %v79 = vrot.slane %v74, %v78
    %v83 = vunpack.c.l.s4 1983009808
    %v84 = vunpack.c.0.s8 %v83
    %v85 = vlaneseq
    %v86 = vshrl.u32 %v85, 7
    %v87 = vsub.s32 %v84, %v86
    %v88 = vrot.slane %v41, %v87
    %v89 = vcombine.high %v88, %v88
    %92 = vmatprep.subr.mxu0 0.0
    %93 = vmatpush1.msra.mxu0 %v57
    %94 = vmatprep.subr.mxu0 0.0
    %95 = vmatpush1.msra.mxu0 %v56
    %96 = vmatprep.subr.mxu0 0.0
    %97 = vmatpush1.msra.mxu0 %v55
    %98 = vmatprep.subr.mxu0 0.0
    %99 = vmatpush1.msra.mxu0 %v54
    %100 = vmatprep.subr.mxu0 0.0
    %101 = vmatpush1.msra.mxu0 %v53
    %102 = vmatprep.subr.mxu0 0.0
    %103 = vmatpush1.msra.mxu0 %v52
    %104 = vmatprep.subr.mxu0 0.0
    %105 = vmatpush1.msra.mxu0 %v51
    %106 = vmatprep.subr.mxu0 0.0
    %107 = vmatpush1.msra.mxu0 %v50
    %108 = vmatprep.subr.mxu0 0.0
    %109 = vmatpush1.msra.mxu0 %v49
    %110 = vmatprep.subr.mxu0 0.0
    %111 = vmatpush1.msra.mxu0 %v48
    %112 = vmatprep.subr.mxu0 0.0
    %113 = vmatpush1.msra.mxu0 %v47
    %114 = vmatprep.subr.mxu0 0.0
    %115 = vmatpush1.msra.mxu0 %v46
    %116 = vmatprep.subr.mxu0 0.0
    %117 = vmatpush1.msra.mxu0 %v45
    %118 = vmatprep.subr.mxu0 0.0
    %119 = vmatpush1.msra.mxu0 %v44
    %120 = vmatprep.subr.mxu0 0.0
    %121 = vmatpush1.msra.mxu0 %v43
    %122 = vmatprep.subr.mxu0 0.0
    %123 = vmatpush1.msra.mxu0 %v42
    %124 = vmatprep.subr.mxu0 0.0
    %125 = vmatpush2.msra.mxu0 %v73
    %126 = vmatprep.subr.mxu0 0.0
    %127 = vmatpush2.msra.mxu0 %v72
    %128 = vmatprep.subr.mxu0 0.0
    %129 = vmatpush2.msra.mxu0 %v71
    %130 = vmatprep.subr.mxu0 0.0
    %131 = vmatpush2.msra.mxu0 %v70
    %132 = vmatprep.subr.mxu0 0.0
    %133 = vmatpush2.msra.mxu0 %v69
    %134 = vmatprep.subr.mxu0 0.0
    %135 = vmatpush2.msra.mxu0 %v68
    %136 = vmatprep.subr.mxu0 0.0
    %137 = vmatpush2.msra.mxu0 %v67
    %138 = vmatprep.subr.mxu0 0.0
    %139 = vmatpush2.msra.mxu0 %v66
    %140 = vmatprep.subr.mxu0 0.0
    %141 = vmatpush2.msra.mxu0 %v65
    %142 = vmatprep.subr.mxu0 0.0
    %143 = vmatpush2.msra.mxu0 %v64
    %144 = vmatprep.subr.mxu0 0.0
    %145 = vmatpush2.msra.mxu0 %v63
    %146 = vmatprep.subr.mxu0 0.0
    %147 = vmatpush2.msra.mxu0 %v62
    %148 = vmatprep.subr.mxu0 0.0
    %149 = vmatpush2.msra.mxu0 %v61
    %150 = vmatprep.subr.mxu0 0.0
    %151 = vmatpush2.msra.mxu0 %v60
    %152 = vmatprep.subr.mxu0 0.0
    %153 = vmatpush2.msra.mxu0 %v59
    %154 = vmatprep.subr.mxu0 0.0
    %155 = vmatpush2.msra.mxu0 %v58
    %156 = vmatprep.mubr.f32.mxu0 %v89
    %157 = vmatmul.mubr.f32.gmra.mxu0 %v88
    %v158 = vpop.f32.mrf.mxu0
    %v159 = vadd.f32 %v79, %v158
    %v160 = vpop.f32.mrf.mxu0
    %161 = vdwg.mxu0
    %v162 = vmax.f32 %v159, 0.0
    %v163 = vand.u32 2147483647, %v159
    %v164 = vsub.f32 0.0, %v163
    %v165 = vmul.f32 %v164, 1.442695
    %v166 = vpow.pop %v165
    %v167 = vadd.f32 %v166, 1.0
    %v168 = vlog2.pop %v167
    %v169 = vmul.f32 %v168, 0.6931472
    %v170 = vmul.f32 -0.5, %v166
    %v171 = vadd.f32 %v170, 1.0
    %v172 = vmul.f32 %v171, %v166
    %v173 = vand.u32 2147483647, %v166
    %vm174 = vcmp.lt.f32.partialorder %v173, 0.0004427343
    %v175 = vsel %vm174, %v172, %v169
    %v176 = vadd.f32 %v162, %v175
    %177 = vst [vmem:[#allocation7] sm:$0x3] %v176
    // Predicated region
    $region22: #{tpu_custom_call.1} parent=1 // pred_check
      _
    $region23: #{tpu_custom_call.1} parent=1 // pred_check_branch
      %179 = sbr.rel (0) target = $region25
    $region24: #{tpu_custom_call.1} parent=1 // pred_region
      %s181 = ssub.s32 32, 32
      %182 = vsyncadd [#allocation4], %s181
      %s184 = sshll.u32 [#allocation7], 4
      %s185 = int_to_ptr.vmem [resolvable:$true] %s184
      %187 = dma.vmem_to_hbm [thread:$0]  %s185, 32, %s3, [#allocation4]
    $region25: #{tpu_custom_call.1} parent=1 // pred_fallthru
      _
    // Predicated region
    $region26: #{tpu_custom_call.1} parent=1 // pred_check
      _
    $region27: #{tpu_custom_call.1} parent=1 // pred_check_branch
      %189 = sbr.rel (0) target = $region29
    $region28: #{tpu_custom_call.1} parent=1 // pred_region
      %190 = dma.done [#allocation4], 32
    $region29: #{tpu_custom_call.1} parent=1 // pred_fallthru
      _
    %191 = vsyncpa [#allocation3], 1
    %192 = vsyncpa [#allocation6], 1
    %193 = vsyncpa [#allocation4], 1

</llo_original>
